<compile_context>
chip_gen: v5e
topology: v5e:2x2
jax: 0.10.0
libtpu: 0.0.40
codegen_flags: <defaults>
</compile_context>

<pallas_src>
import jax
import jax.numpy as jnp
from jax.experimental import pallas as pl
from jax.experimental.pallas import tpu as pltpu


def _round_up(x, m):
    return ((x + m - 1) // m) * m


def _lrn_kernel(band_ref, x_ref, o_ref):
    # band_ref: (Cg, Cg) f32 block-diagonal 5-tap band matrix (grid-invariant)
    # x_ref / o_ref block shape: (1, Cg, T)
    x = x_ref[0]                                          # (Cg, T)
    x2 = x * x
    # Cross-channel windowed sum on the MXU (keep f32 for accuracy).
    s = jnp.dot(band_ref[...], x2, preferred_element_type=jnp.float32)
    t = 2.0 + 0.0001 * s
    # t^{-0.75} == rsqrt(t * sqrt(t)): 2 EUP ops, no pow (exp+log) and no divide.
    inv = jax.lax.rsqrt(t * jnp.sqrt(t))
    o_ref[0] = (x * inv).astype(o_ref.dtype)


def _pick_group(B, C):
    """Pack g batch images along the sublane (channel) axis when C < 8."""
    if C >= 8:
        return 1
    target = max(1, 8 // C)
    for g in range(min(B, target), 0, -1):
        if B % g == 0:
            return g
    return 1


def lrn(x, *, max_tile=2048):
    """x: (B, C, H, W) float32 -> (B, C, H, W) float32."""
    B, C, H, W = x.shape
    HW = H * W

    g = _pick_group(B, C)
    Bg, Cg = B // g, g * C

    # Lane tile: multiple of 128, capped so the per-block VMEM footprint stays small.
    T = max_tile
    while T > 128 and Cg * T * 4 > (4 << 20):
        T //= 2
    T = min(T, _round_up(HW, 128))
    HW_pad = _round_up(HW, T)

    x3 = x.reshape(B, C, HW)
    if HW_pad != HW:
        x3 = jnp.pad(x3, ((0, 0), (0, 0), (0, HW_pad - HW)))
    xg = x3.reshape(Bg, Cg, HW_pad)

    # (Cg, Cg) block-diagonal band: ones where |i-j| <= 2 inside each C-block,
    # so packed batches never leak into each other.
    idx = jnp.arange(C)
    band_c = (jnp.abs(idx[:, None] - idx[None, :]) <= 2).astype(jnp.float32)
    band = jnp.kron(jnp.eye(g, dtype=jnp.float32), band_c)        # (Cg, Cg)

    block_bytes = Cg * T * 4
    band_bytes = Cg * Cg * 4
    vmem_limit = int(min(max(32 << 20, 6 * block_bytes + 3 * band_bytes), 48 << 20))

    cost = pl.CostEstimate(
        flops=10 * B * C * HW,
        transcendentals=2 * B * C * HW,
        bytes_accessed=2 * B * C * HW * 4,
    )

    out = pl.pallas_call(
        _lrn_kernel,
        out_shape=jax.ShapeDtypeStruct((Bg, Cg, HW_pad), x.dtype),
        grid_spec=pltpu.PrefetchScalarGridSpec(
            num_scalar_prefetch=0,
            grid=(Bg, HW_pad // T),
            in_specs=[
                pl.BlockSpec((Cg, Cg), lambda b, t: (0, 0)),        # band (constant)
                pl.BlockSpec((1, Cg, T), lambda b, t: (b, 0, t)),   # input tile
            ],
            out_specs=pl.BlockSpec((1, Cg, T), lambda b, t: (b, 0, t)),
        ),
        compiler_params=pltpu.CompilerParams(
            dimension_semantics=("parallel", "parallel"),
            vmem_limit_bytes=vmem_limit,
        ),
        cost_estimate=cost,
    )(band, xg)

    out = out.reshape(B, C, HW_pad)[:, :, :HW]
    return out.reshape(B, C, H, W)


def _lrn_ref(x):
    """Pure-JAX reference mirroring the PyTorch forward exactly."""
    B, C, H, W = x.shape
    x_sq = (x ** 2)[:, None]                               # (B,1,C,H,W)
    pad = jnp.zeros((B, 1, 1, H, W), x.dtype)
    tiles = []
    for k in range(5):
        parts = [pad] * k + [x_sq] + [pad] * (4 - k)
        tiles.append(jnp.concatenate(parts, axis=2))        # (B,1,C+4,H,W)
    x_tile = jnp.concatenate(tiles, axis=1)                  # (B,5,C+4,H,W)
    x_sumsq = x_tile.sum(axis=1)[:, 2:-2, :, :]              # (B,C,H,W)
    return x / (2.0 + 0.0001 * x_sumsq) ** 0.75


if __name__ == "__main__":
    key = jax.random.PRNGKey(0)
    B, C, H, W = 2, 4, 16, 16
    x = jax.random.normal(key, (B, C, H, W), dtype=jnp.float32)

    y = lrn(x)
    jax.block_until_ready(y)

    y_ref = _lrn_ref(x)
    assert y.shape == (B, C, H, W)
    assert jnp.allclose(y, y_ref, atol=1e-5, rtol=1e-5), "mismatch vs reference"

    print("KERNEL_OK")
</pallas_src>

<mosaic_0001>
module attributes {stable_mosaic.version = 11 : i64} {
  func.func @_lrn_kernel(%arg0: i32, %arg1: i32, %arg2: memref<8x8xf32, #tpu.memory_space<vmem>>, %arg3: memref<1x8x256xf32, #tpu.memory_space<vmem>>, %arg4: memref<1x8x256xf32, #tpu.memory_space<vmem>>) attributes {dimension_semantics = [#tpu.dimension_semantics<parallel>, #tpu.dimension_semantics<parallel>], iteration_bounds = array<i64: 1, 1>, scalar_prefetch = 0 : i64, scratch_operands = 0 : i64, tpu.core_type = #tpu.core_type<tc>, window_params = [{pipeline_mode = #tpu.pipeline_mode<synchronous>, transform_indices = @transform_0, window_bounds = array<i64: 8, 8>}, {transform_indices = @transform_1, window_bounds = array<i64: 1, 8, 256>}, {transform_indices = @transform_2, window_bounds = array<i64: 1, 8, 256>}]} {
    %c0 = arith.constant 0 : index
    %c0_0 = arith.constant 0 : index
    %c0_1 = arith.constant 0 : index
    %0 = vector.load %arg3[%c0, %c0_0, %c0_1] : memref<1x8x256xf32, #tpu.memory_space<vmem>>, vector<1x8x256xf32>
    %1 = vector.shape_cast %0 : vector<1x8x256xf32> to vector<8x256xf32>
    %2 = arith.mulf %1, %1 : vector<8x256xf32>
    %c0_2 = arith.constant 0 : index
    %c0_3 = arith.constant 0 : index
    %3 = vector.load %arg2[%c0_2, %c0_3] : memref<8x8xf32, #tpu.memory_space<vmem>>, vector<8x8xf32>
    %cst = arith.constant dense<0.000000e+00> : vector<8x256xf32>
    %4 = tpu.matmul %3, %2, %cst {dimension_numbers = #tpu.dot_dimension_numbers<[1], [0], [0], [1], [0, 0, 1, 1], [], []>} : vector<8x8xf32>, vector<8x256xf32>, vector<8x256xf32> -> vector<8x256xf32>
    %cst_4 = arith.constant 9.99999974E-5 : f32
    %5 = vector.broadcast %cst_4 : f32 to vector<8x256xf32>
    %6 = arith.mulf %5, %4 : vector<8x256xf32>
    %cst_5 = arith.constant 2.000000e+00 : f32
    %7 = vector.broadcast %cst_5 : f32 to vector<8x256xf32>
    %8 = arith.addf %7, %6 : vector<8x256xf32>
    %9 = math.sqrt %8 : vector<8x256xf32>
    %10 = arith.mulf %8, %9 : vector<8x256xf32>
    %11 = math.rsqrt %10 : vector<8x256xf32>
    %12 = arith.mulf %1, %11 : vector<8x256xf32>
    %c0_6 = arith.constant 0 : index
    %c0_7 = arith.constant 0 : index
    %c0_8 = arith.constant 0 : index
    %13 = vector.load %arg4[%c0_6, %c0_7, %c0_8] : memref<1x8x256xf32, #tpu.memory_space<vmem>>, vector<1x8x256xf32>
    %14 = vector.shape_cast %13 : vector<1x8x256xf32> to vector<8x256xf32>
    %15 = vector.shape_cast %12 : vector<8x256xf32> to vector<1x8x256xf32>
    tpu.vector_store %arg4[%c0_6, %c0_7, %c0_8], %15 {strides = array<i32>} : memref<1x8x256xf32, #tpu.memory_space<vmem>>, vector<1x8x256xf32>,
    return
  }
  func.func @transform_0(%arg0: i32, %arg1: i32) -> (i32, i32) {
    %c0_i32 = arith.constant 0 : i32
    %c0_i32_0 = arith.constant 0 : i32
    %c0_i32_1 = arith.constant 0 : i32
    return %c0_i32, %c0_i32_0 : i32, i32
  }
  func.func @transform_1(%arg0: i32, %arg1: i32) -> (i32, i32, i32) {
    %c0_i32 = arith.constant 0 : i32
    %c0_i32_0 = arith.constant 0 : i32
    return %arg0, %c0_i32, %arg1 : i32, i32, i32
  }
  func.func @transform_2(%arg0: i32, %arg1: i32) -> (i32, i32, i32) {
    %c0_i32 = arith.constant 0 : i32
    %c0_i32_0 = arith.constant 0 : i32
    return %arg0, %c0_i32, %arg1 : i32, i32, i32
  }
}

</mosaic_0001>

<llo_original>
// kernel: tpu_custom_call.1
$region0: #{tpu_custom_call.1}
  #allocation0 [shape = 'u32[]', space=smem, size = 0x4, offset = 0x4, fixed_abs, tag = 'smem constant byte address 0x4 - core index']
  #allocation1 [shape = 'u32[72,128]{1,0:T(1,128)}', space=vmem, size = 0x9000, scoped, tag = 'internal scratch']
  %s0 = inlined_call_operand.hbm [shape: f32[8,8], index: 0, kind: input, shape index: {}]
  %s1 = inlined_call_operand.hbm [shape: f32[1,8,256], index: 1, kind: input, shape index: {}]
  %s2 = inlined_call_operand.hbm [shape: f32[1,8,256], index: 2, kind: output, shape index: {}]
  %s3 = sld [smem:[#allocation0]]
  $region26: #{tpu_custom_call.1} parent=0
    _
  %s5 = ssub.s32 1, %s3
  %s6 = scalar_select 0, %s5, %s3
  $region1: #{tpu_custom_call.1} parent=0
    #allocation2 [shape = 'u8[4096]{0}', space=vmem, size = 0x1000, scoped, tag = 'input window, operand 0, single buffered']
    #allocation3 [shape = 's32[1]{0}', space=sflag, size = 0x4, scoped, tag = 'scoped memory for tpu_custom_call.1']
    #allocation4 [shape = 's32[1]{0}', space=sflag, size = 0x4, scoped, tag = 'scoped memory for tpu_custom_call.1']
    #allocation5 [shape = 'u8[8192]{0}', space=vmem, size = 0x2000, scoped, tag = 'input window, operand 1, single buffered']
    #allocation6 [shape = 's32[1]{0}', space=sflag, size = 0x4, scoped, tag = 'scoped memory for tpu_custom_call.1']
    #allocation7 [shape = 'u8[8192]{0}', space=vmem, size = 0x2000, scoped, tag = 'output window, operand 0, single buffered']
    %7 = vsyncpa [#allocation3], 0
    %8 = vsyncpa [#allocation6], 0
    %9 = vsyncpa [#allocation4], 0
    // Predicated region
    $region2: #{tpu_custom_call.1} parent=1 // pred_check
      _
    $region3: #{tpu_custom_call.1} parent=1 // pred_check_branch
      %11 = sbr.rel (0) target = $region5
    $region4: #{tpu_custom_call.1} parent=1 // pred_region
      %13 = vsyncadd [#allocation3], 0
      %s15 = sshll.u32 %s0, 4
      %s16 = int_to_ptr.hbm [resolvable:$true] %s15
      %s17 = sshll.u32 [#allocation2], 4
      %s18 = int_to_ptr.vmem [resolvable:$true] %s17
      %20 = dma.hbm_to_vmem [thread:$0]  %s16, 128, %s18, [#allocation3]
    $region5: #{tpu_custom_call.1} parent=1 // pred_fallthru
      _
    // Predicated region
    $region6: #{tpu_custom_call.1} parent=1 // pred_check
      _
    $region7: #{tpu_custom_call.1} parent=1 // pred_check_branch
      %22 = sbr.rel (0) target = $region9
    $region8: #{tpu_custom_call.1} parent=1 // pred_region
      %24 = vsyncadd [#allocation6], 0
      %s26 = sshll.u32 %s1, 4
      %s27 = int_to_ptr.hbm [resolvable:$true] %s26
      %s28 = sshll.u32 [#allocation5], 4
      %s29 = int_to_ptr.vmem [resolvable:$true] %s28
      %31 = dma.hbm_to_vmem [thread:$0]  %s27, 256, %s29, [#allocation6]
    $region9: #{tpu_custom_call.1} parent=1 // pred_fallthru
      _
    // Predicated region
    $region10: #{tpu_custom_call.1} parent=1 // pred_check
      _
    $region11: #{tpu_custom_call.1} parent=1 // pred_check_branch
      %33 = sbr.rel (0) target = $region13
    $region12: #{tpu_custom_call.1} parent=1 // pred_region
      %35 = dma.done [#allocation3], 128
    $region13: #{tpu_custom_call.1} parent=1 // pred_fallthru
      _
    // Predicated region
    $region14: #{tpu_custom_call.1} parent=1 // pred_check
      _
    $region15: #{tpu_custom_call.1} parent=1 // pred_check_branch
      %37 = sbr.rel (0) target = $region17
    $region16: #{tpu_custom_call.1} parent=1 // pred_region
      %39 = dma.done [#allocation6], 256
    $region17: #{tpu_custom_call.1} parent=1 // pred_fallthru
      _
    %v40 = vld [vmem:[#allocation5] sm:$0xff]
    %v41 = vld [vmem:[#allocation5 + $0x8] sm:$0xff]
    %v42 = vmul.f32 %v40, %v40
    %v43 = vmul.f32 %v41, %v41
    %v44 = vld [vmem:[#allocation2] sm:$0xff]
    %vm45 = vcmask 64512
    %v47 = vsel %vm45, %v44, 0
    %49 = vmatpush.msra.mxu0 0.0
    %50 = vmatpush.msra.mxu0 0.0
    %51 = vmatpush.msra.mxu0 0.0
    %52 = vmatpush.msra.mxu0 0.0
    %53 = vmatpush.msra.mxu0 0.0
    %54 = vmatpush.msra.mxu0 0.0
    %55 = vmatpush.msra.mxu0 0.0
    %56 = vmatpush.msra.mxu0 0.0
    %57 = vmatpush.msra.mxu0 0.0
    %58 = vmatpush.msra.mxu0 0.0
    %59 = vmatpush.msra.mxu0 0.0
    %60 = vmatpush.msra.mxu0 0.0
    %61 = vmatpush.msra.mxu0 0.0
    %62 = vmatpush.msra.mxu0 0.0
    %63 = vmatpush.msra.mxu0 0.0
    %64 = vmatpush.msra.mxu0 %v42
    %65 = vmatmul.f32.gmra.mxu0 %v47
    %v66 = vpop.f32.mrf.mxu0
    %v67 = vadd.f32 0.0, %v66
    %68 = vdwg.mxu0
    %69 = vmatpush.msra.mxu0 0.0
    %70 = vmatpush.msra.mxu0 0.0
    %71 = vmatpush.msra.mxu0 0.0
    %72 = vmatpush.msra.mxu0 0.0
    %73 = vmatpush.msra.mxu0 0.0
    %74 = vmatpush.msra.mxu0 0.0
    %75 = vmatpush.msra.mxu0 0.0
    %76 = vmatpush.msra.mxu0 0.0
    %77 = vmatpush.msra.mxu0 0.0
    %78 = vmatpush.msra.mxu0 0.0
    %79 = vmatpush.msra.mxu0 0.0
    %80 = vmatpush.msra.mxu0 0.0
    %81 = vmatpush.msra.mxu0 0.0
    %82 = vmatpush.msra.mxu0 0.0
    %83 = vmatpush.msra.mxu0 0.0
    %84 = vmatpush.msra.mxu0 %v43
    %85 = vmatmul.f32.gmra.mxu0 %v47
    %v86 = vpop.f32.mrf.mxu0
    %v87 = vadd.f32 0.0, %v86
    %88 = vdwg.mxu0
    %v89 = vmul.f32 %v67, 0.0001
    %v90 = vmul.f32 %v87, 0.0001
    %v91 = vadd.f32 %v89, 2.0
    %v92 = vadd.f32 %v90, 2.0
    %v93 = vrsqrt.pop %v91
    %v94 = vmul.f32 %v93, %v91
    %v95 = vmul.f32 %v94, %v93
    %v96 = vmul.f32 0.5, %v95
    %v97 = vsub.f32 1.5, %v96
    %v98 = vmul.f32 %v93, %v97
    %v99 = vmul.f32 %v91, %v98
    %vm100 = vcmp.eq.f32.partialorder %v91, inf
    %v101 = vsel %vm100, %v91, %v99
    %vm102 = vcmp.eq.f32.partialorder %v91, 0.0
    %v103 = vand.u32 %v91, 2147483648
    %v104 = vsel %vm102, %v103, %v101
    %v105 = vrsqrt.pop %v92
    %v106 = vmul.f32 %v105, %v92
    %v107 = vmul.f32 %v106, %v105
    %v108 = vmul.f32 0.5, %v107
    %v109 = vsub.f32 1.5, %v108
    %v110 = vmul.f32 %v105, %v109
    %v111 = vmul.f32 %v92, %v110
    %vm112 = vcmp.eq.f32.partialorder %v92, inf
    %v113 = vsel %vm112, %v92, %v111
    %vm114 = vcmp.eq.f32.partialorder %v92, 0.0
    %v115 = vand.u32 %v92, 2147483648
    %v116 = vsel %vm114, %v115, %v113
    %v117 = vmul.f32 %v91, %v104
    %v118 = vmul.f32 %v92, %v116
    %v119 = vrsqrt.pop %v117
    %v120 = vmul.f32 %v119, %v117
    %v121 = vmul.f32 %v120, %v119
    %v122 = vmul.f32 0.5, %v121
    %v123 = vsub.f32 1.5, %v122
    %v124 = vmul.f32 %v119, %v123
    %vm125 = vweird.f32 %v117
    %vm126 = vweird.f32 %v119
    %vm127 = vmor %vm125, %vm126
    %v128 = vsel %vm127, %v119, %v124
    %v129 = vrsqrt.pop %v118
    %v130 = vmul.f32 %v129, %v118
    %v131 = vmul.f32 %v130, %v129
    %v132 = vmul.f32 0.5, %v131
    %v133 = vsub.f32 1.5, %v132
    %v134 = vmul.f32 %v129, %v133
    %vm135 = vweird.f32 %v118
    %vm136 = vweird.f32 %v129
    %vm137 = vmor %vm135, %vm136
    %v138 = vsel %vm137, %v129, %v134
    %v139 = vmul.f32 %v40, %v128
    %v140 = vmul.f32 %v41, %v138
    %141 = vst [vmem:[#allocation7] sm:$0xff] %v139
    %142 = vst [vmem:[#allocation7 + $0x8] sm:$0xff] %v140
    // Predicated region
    $region18: #{tpu_custom_call.1} parent=1 // pred_check
      _
    $region19: #{tpu_custom_call.1} parent=1 // pred_check_branch
      %144 = sbr.rel (0) target = $region21
    $region20: #{tpu_custom_call.1} parent=1 // pred_region
      %146 = vsyncadd [#allocation4], 0
      %s148 = sshll.u32 [#allocation7], 4
      %s149 = int_to_ptr.vmem [resolvable:$true] %s148
      %s150 = sshll.u32 %s2, 4
      %s151 = int_to_ptr.hbm [resolvable:$true] %s150
      %153 = dma.vmem_to_hbm [thread:$0]  %s149, 256, %s151, [#allocation4]
    $region21: #{tpu_custom_call.1} parent=1 // pred_fallthru
      _
    // Predicated region
    $region22: #{tpu_custom_call.1} parent=1 // pred_check
      _
    $region23: #{tpu_custom_call.1} parent=1 // pred_check_branch
      %155 = sbr.rel (0) target = $region25
    $region24: #{tpu_custom_call.1} parent=1 // pred_region
      %157 = dma.done [#allocation4], 256
    $region25: #{tpu_custom_call.1} parent=1 // pred_fallthru
      _
    %158 = vsyncpa [#allocation3], 1
    %159 = vsyncpa [#allocation6], 1
    %160 = vsyncpa [#allocation4], 1

</llo_original>
